<compile_context>
chip_gen: v6e
topology: v6e:2x2x1
jax: 0.10.0
libtpu: 0.0.40
codegen_flags: <defaults>
</compile_context>

<pallas_src>
import functools

import jax
import jax.numpy as jnp
from jax.experimental import pallas as pl
from jax.experimental.pallas import tpu as pltpu


def _round_up(x, m):
    return (x + m - 1) // m * m


def dsb_kernel(n_cat, cat_ref, nc_ref, w1a_ref, w1e_ref, s1_ref, t1_ref,
               w2_ref, s2_ref, t2_ref, w3_ref, b3_ref, o_ref):
    nc = nc_ref[...]                        # (TB, NCP)   bf16, lane-padded
    cat = cat_ref[...]                      # (TB, n_cat) int32 offset indices
    tb = nc.shape[0]
    card_pad = w1e_ref.shape[0]

    # One-hot over the stacked categorical vocabulary (offsets pre-added).
    iota = jax.lax.broadcasted_iota(jnp.int32, (tb, card_pad), 1)
    oh = (iota == cat[:, 0:1]).astype(jnp.float32)
    for j in range(1, n_cat):
        oh += (iota == cat[:, j:j + 1]).astype(jnp.float32)
    oh = oh.astype(jnp.bfloat16)

    # lin1 (non-cat part + embedding-fused part) + folded bn1 + relu
    h1 = jnp.dot(nc, w1a_ref[...], preferred_element_type=jnp.float32)
    h1 += jnp.dot(oh, w1e_ref[...], preferred_element_type=jnp.float32)
    h1 = jnp.maximum(h1 * s1_ref[...] + t1_ref[...], 0.0)

    # lin2 + folded bn2 + relu
    h2 = jnp.dot(h1.astype(jnp.bfloat16), w2_ref[...],
                 preferred_element_type=jnp.float32)
    h2 = jnp.maximum(h2 * s2_ref[...] + t2_ref[...], 0.0)

    # head + relu + clamp(0, 1)  (== clip(head_out, 0, 1))
    y = jnp.dot(h2.astype(jnp.bfloat16), w3_ref[...],
                preferred_element_type=jnp.float32) + b3_ref[...]
    o_ref[...] = jnp.clip(y, 0.0, 1.0)


def dsb_regressor_forward(non_cat_pad, cat_off, kparams, *, tb=512):
    """non_cat_pad: (B, NCP) bf16; cat_off: (B, n_cat) int32 offset indices."""
    (w1a, w1e, s1, t1, w2, s2, t2, w3, b3) = kparams
    B = non_cat_pad.shape[0]
    n_cat = cat_off.shape[1]
    NCP, H1P = w1a.shape
    CARD_PAD = w1e.shape[0]
    H2P = w2.shape[1]
    CP = w3.shape[1]

    TB = tb if B >= tb else _round_up(B, 8)
    Bp = _round_up(B, TB)
    if Bp != B:
        non_cat_pad = jnp.pad(non_cat_pad, ((0, Bp - B), (0, 0)))
        cat_off = jnp.pad(cat_off, ((0, Bp - B), (0, 0)))

    resident = lambda shape: pl.BlockSpec(shape, lambda i: (0, 0))
    weight_elems = NCP * H1P + CARD_PAD * H1P + H1P * H2P + H2P * CP
    flops = 2 * Bp * weight_elems
    bytes_accessed = (Bp * (NCP * 2 + n_cat * 4 + CP * 4)
                      + weight_elems * 2 + (2 * H1P + 2 * H2P + CP) * 4)

    out = pl.pallas_call(
        functools.partial(dsb_kernel, n_cat),
        out_shape=jax.ShapeDtypeStruct((Bp, CP), jnp.float32),
        grid=(Bp // TB,),
        in_specs=[
            pl.BlockSpec((TB, n_cat), lambda i: (i, 0)),   # cat indices tile
            pl.BlockSpec((TB, NCP), lambda i: (i, 0)),     # non-cat features tile
            resident((NCP, H1P)), resident((CARD_PAD, H1P)),
            resident((1, H1P)), resident((1, H1P)),
            resident((H1P, H2P)), resident((1, H2P)), resident((1, H2P)),
            resident((H2P, CP)), resident((1, CP)),
        ],
        out_specs=pl.BlockSpec((TB, CP), lambda i: (i, 0)),
        compiler_params=pltpu.CompilerParams(
            dimension_semantics=("parallel",),
            vmem_limit_bytes=32 * 1024 * 1024),
        cost_estimate=pl.CostEstimate(
            flops=flops, transcendentals=0, bytes_accessed=bytes_accessed),
    )(cat_off, non_cat_pad, w1a, w1e, s1, t1, w2, s2, t2, w3, b3)
    return out[:B, 0]


def build_params(key, cat_dims, n_non_categorical, h1=150, h2=50, eps=1e-5):
    n_emb_out = sum(d for _, d in cat_dims)
    d_in = n_non_categorical + n_emb_out
    ks = jax.random.split(key, 16)

    emb_keys = jax.random.split(ks[0], len(cat_dims))
    emb_tables = [jax.random.normal(k, (c, d), jnp.float32)
                  for k, (c, d) in zip(emb_keys, cat_dims)]

    # torch nn.Linear stores (out, in); build transposed (in, out) directly.
    W1 = jax.random.normal(ks[1], (d_in, h1), jnp.float32) * 0.1
    b1 = jax.random.normal(ks[2], (h1,), jnp.float32) * 0.1
    W2 = jax.random.normal(ks[3], (h1, h2), jnp.float32) * 0.1
    b2 = jax.random.normal(ks[4], (h2,), jnp.float32) * 0.1
    W3 = jax.random.normal(ks[5], (h2, 1), jnp.float32) * 0.1
    b3 = jax.random.normal(ks[6], (1,), jnp.float32) * 0.1

    # BatchNorm1d eval-mode parameters / running stats (non-trivial).
    g1 = 1.0 + 0.05 * jax.random.normal(ks[7], (h1,), jnp.float32)
    be1 = 0.05 * jax.random.normal(ks[8], (h1,), jnp.float32)
    m1 = 0.05 * jax.random.normal(ks[9], (h1,), jnp.float32)
    v1 = jnp.abs(1.0 + 0.05 * jax.random.normal(ks[10], (h1,), jnp.float32))
    g2 = 1.0 + 0.05 * jax.random.normal(ks[11], (h2,), jnp.float32)
    be2 = 0.05 * jax.random.normal(ks[12], (h2,), jnp.float32)
    m2 = 0.05 * jax.random.normal(ks[13], (h2,), jnp.float32)
    v2 = jnp.abs(1.0 + 0.05 * jax.random.normal(ks[14], (h2,), jnp.float32))

    raw = dict(emb=emb_tables, W1=W1, b1=b1, bn1=(g1, be1, m1, v1, eps),
               W2=W2, b2=b2, bn2=(g2, be2, m2, v2, eps), W3=W3, b3=b3)

    # ---- fold BN (eval) + fold linear biases through BN ----
    s1 = g1 / jnp.sqrt(v1 + eps)
    t1 = be1 - m1 * s1 + b1 * s1
    s2 = g2 / jnp.sqrt(v2 + eps)
    t2 = be2 - m2 * s2 + b2 * s2

    # ---- lane padding to multiples of 128 ----
    NCP = _round_up(max(n_non_categorical, 1), 128)
    H1P = _round_up(h1, 128)
    H2P = _round_up(h2, 128)
    CP = 128
    sum_cards = sum(c for c, _ in cat_dims)
    CARD_PAD = _round_up(sum_cards, 128)

    w1a = jnp.zeros((NCP, H1P), jnp.float32)
    w1a = w1a.at[:n_non_categorical, :h1].set(W1[:n_non_categorical])

    # Embedding-fused part: row (off_j + c) = emb_table_j[c] @ W1_emb_block_j.
    w1e = jnp.zeros((CARD_PAD, H1P), jnp.float32)
    row, col = 0, n_non_categorical
    for (card, dim), tbl in zip(cat_dims, emb_tables):
        w1e = w1e.at[row:row + card, :h1].set(tbl @ W1[col:col + dim])
        row += card
        col += dim

    w2p = jnp.zeros((H1P, H2P), jnp.float32).at[:h1, :h2].set(W2)
    w3p = jnp.zeros((H2P, CP), jnp.float32).at[:h2, :1].set(W3)

    def row_pad(v, n, fill):
        return jnp.full((1, n), fill, jnp.float32).at[0, :v.shape[0]].set(v)

    kparams = (
        w1a.astype(jnp.bfloat16), w1e.astype(jnp.bfloat16),
        row_pad(s1, H1P, 1.0), row_pad(t1, H1P, 0.0),
        w2p.astype(jnp.bfloat16),
        row_pad(s2, H2P, 1.0), row_pad(t2, H2P, 0.0),
        w3p.astype(jnp.bfloat16), row_pad(b3, CP, 0.0),
    )
    offsets = jnp.array(
        [sum(c for c, _ in cat_dims[:j]) for j in range(len(cat_dims))],
        jnp.int32)
    return raw, kparams, offsets, NCP


def reference_forward(non_cat, cat, raw):
    """Pure-JAX f32 reference matching DSBRegressor eval-mode forward."""
    emb = jnp.concatenate(
        [raw["emb"][j][cat[:, j]] for j in range(len(raw["emb"]))], axis=1)
    x = jnp.concatenate([non_cat, emb], axis=1)

    def bn(h, p):
        g, b, m, v, eps = p
        return (h - m) / jnp.sqrt(v + eps) * g + b

    h1 = jax.nn.relu(bn(x @ raw["W1"] + raw["b1"], raw["bn1"]))
    h2 = jax.nn.relu(bn(h1 @ raw["W2"] + raw["b2"], raw["bn2"]))
    y = jax.nn.relu(h2 @ raw["W3"] + raw["b3"])
    return jnp.clip(y.reshape(-1), 0.0, 1.0)


if __name__ == "__main__":
    key = jax.random.PRNGKey(0)
    k_par, k_nc, k_cat = jax.random.split(key, 3)

    cat_dims = [(10, 3), (7, 5), (5, 4)]          # (cardinality, emb_dim)
    n_non_categorical = 4
    B = 8

    raw, kparams, offsets, NCP = build_params(k_par, cat_dims, n_non_categorical)

    non_cat = jax.random.normal(k_nc, (B, n_non_categorical), jnp.float32)
    ck = jax.random.split(k_cat, len(cat_dims))
    cat = jnp.stack(
        [jax.random.randint(ck[j], (B,), 0, cat_dims[j][0], jnp.int32)
         for j in range(len(cat_dims))], axis=1)                  # (B, 3)

    # Glue: lane-pad non-cat features, offset categorical indices into the
    # stacked vocabulary (emb_drop / drop are identity in eval mode).
    nc_pad = jnp.zeros((B, NCP), jnp.bfloat16).at[:, :n_non_categorical].set(
        non_cat.astype(jnp.bfloat16))
    cat_off = cat + offsets[None, :]

    out = dsb_regressor_forward(nc_pad, cat_off, kparams)          # (B,)
    out = jax.block_until_ready(out)

    ref = reference_forward(non_cat, cat, raw)
    assert out.shape == (B,)
    assert bool(jnp.all((out >= 0.0) & (out <= 1.0)))
    assert bool(jnp.allclose(out, ref, atol=3e-2, rtol=3e-2))
    print("KERNEL_OK")
</pallas_src>

<mosaic_0001>
module attributes {stable_mosaic.version = 11 : i64} {
  func.func @dsb_kernel(%arg0: i32, %arg1: memref<8x3xi32, #tpu.memory_space<vmem>>, %arg2: memref<8x128xbf16, #tpu.memory_space<vmem>>, %arg3: memref<128x256xbf16, #tpu.memory_space<vmem>>, %arg4: memref<128x256xbf16, #tpu.memory_space<vmem>>, %arg5: memref<1x256xf32, #tpu.memory_space<vmem>>, %arg6: memref<1x256xf32, #tpu.memory_space<vmem>>, %arg7: memref<256x128xbf16, #tpu.memory_space<vmem>>, %arg8: memref<1x128xf32, #tpu.memory_space<vmem>>, %arg9: memref<1x128xf32, #tpu.memory_space<vmem>>, %arg10: memref<128x128xbf16, #tpu.memory_space<vmem>>, %arg11: memref<1x128xf32, #tpu.memory_space<vmem>>, %arg12: memref<8x128xf32, #tpu.memory_space<vmem>>) attributes {dimension_semantics = [#tpu.dimension_semantics<parallel>], iteration_bounds = array<i64: 1>, scalar_prefetch = 0 : i64, scratch_operands = 0 : i64, tpu.core_type = #tpu.core_type<tc>, window_params = [{transform_indices = @transform_0, window_bounds = array<i64: 8, 3>}, {transform_indices = @transform_1, window_bounds = array<i64: 8, 128>}, {pipeline_mode = #tpu.pipeline_mode<synchronous>, transform_indices = @transform_2, window_bounds = array<i64: 128, 256>}, {pipeline_mode = #tpu.pipeline_mode<synchronous>, transform_indices = @transform_3, window_bounds = array<i64: 128, 256>}, {pipeline_mode = #tpu.pipeline_mode<synchronous>, transform_indices = @transform_4, window_bounds = array<i64: 1, 256>}, {pipeline_mode = #tpu.pipeline_mode<synchronous>, transform_indices = @transform_5, window_bounds = array<i64: 1, 256>}, {pipeline_mode = #tpu.pipeline_mode<synchronous>, transform_indices = @transform_6, window_bounds = array<i64: 256, 128>}, {pipeline_mode = #tpu.pipeline_mode<synchronous>, transform_indices = @transform_7, window_bounds = array<i64: 1, 128>}, {pipeline_mode = #tpu.pipeline_mode<synchronous>, transform_indices = @transform_8, window_bounds = array<i64: 1, 128>}, {pipeline_mode = #tpu.pipeline_mode<synchronous>, transform_indices = @transform_9, window_bounds = array<i64: 128, 128>}, {pipeline_mode = #tpu.pipeline_mode<synchronous>, transform_indices = @transform_10, window_bounds = array<i64: 1, 128>}, {transform_indices = @transform_11, window_bounds = array<i64: 8, 128>}]} {
    %c0 = arith.constant 0 : index
    %c0_0 = arith.constant 0 : index
    %0 = vector.load %arg2[%c0, %c0_0] : memref<8x128xbf16, #tpu.memory_space<vmem>>, vector<8x128xbf16>
    %c0_1 = arith.constant 0 : index
    %c0_2 = arith.constant 0 : index
    %1 = vector.load %arg1[%c0_1, %c0_2] : memref<8x3xi32, #tpu.memory_space<vmem>>, vector<8x3xi32>
    %2 = tpu.iota {dimensions = array<i32: 1>} : vector<8x128xi32>
    %3 = vector.extract_strided_slice %1 {offsets = [0, 0], sizes = [8, 1], strides = [1, 1]} : vector<8x3xi32> to vector<8x1xi32>
    %4 = vector.broadcast %3 : vector<8x1xi32> to vector<8x128xi32>
    %5 = arith.cmpi eq, %2, %4 : vector<8x128xi32>
    %6 = arith.extui %5 : vector<8x128xi1> to vector<8x128xi32>
    %7 = arith.sitofp %6 : vector<8x128xi32> to vector<8x128xf32>
    %8 = vector.extract_strided_slice %1 {offsets = [0, 1], sizes = [8, 1], strides = [1, 1]} : vector<8x3xi32> to vector<8x1xi32>
    %9 = vector.broadcast %8 : vector<8x1xi32> to vector<8x128xi32>
    %10 = arith.cmpi eq, %2, %9 : vector<8x128xi32>
    %11 = arith.extui %10 : vector<8x128xi1> to vector<8x128xi32>
    %12 = arith.sitofp %11 : vector<8x128xi32> to vector<8x128xf32>
    %13 = arith.addf %7, %12 : vector<8x128xf32>
    %14 = vector.extract_strided_slice %1 {offsets = [0, 2], sizes = [8, 1], strides = [1, 1]} : vector<8x3xi32> to vector<8x1xi32>
    %15 = vector.broadcast %14 : vector<8x1xi32> to vector<8x128xi32>
    %16 = arith.cmpi eq, %2, %15 : vector<8x128xi32>
    %17 = arith.extui %16 : vector<8x128xi1> to vector<8x128xi32>
    %18 = arith.sitofp %17 : vector<8x128xi32> to vector<8x128xf32>
    %19 = arith.addf %13, %18 : vector<8x128xf32>
    %20 = arith.truncf %19 : vector<8x128xf32> to vector<8x128xbf16>
    %c0_3 = arith.constant 0 : index
    %c0_4 = arith.constant 0 : index
    %21 = vector.load %arg3[%c0_3, %c0_4] : memref<128x256xbf16, #tpu.memory_space<vmem>>, vector<128x256xbf16>
    %cst = arith.constant dense<0.000000e+00> : vector<8x256xf32>
    %22 = tpu.matmul %0, %21, %cst {dimension_numbers = #tpu.dot_dimension_numbers<[1], [0], [0], [1], [0, 0, 1, 1], [], []>} : vector<8x128xbf16>, vector<128x256xbf16>, vector<8x256xf32> -> vector<8x256xf32>
    %c0_5 = arith.constant 0 : index
    %c0_6 = arith.constant 0 : index
    %23 = vector.load %arg4[%c0_5, %c0_6] : memref<128x256xbf16, #tpu.memory_space<vmem>>, vector<128x256xbf16>
    %cst_7 = arith.constant dense<0.000000e+00> : vector<8x256xf32>
    %24 = tpu.matmul %20, %23, %cst_7 {dimension_numbers = #tpu.dot_dimension_numbers<[1], [0], [0], [1], [0, 0, 1, 1], [], []>} : vector<8x128xbf16>, vector<128x256xbf16>, vector<8x256xf32> -> vector<8x256xf32>
    %25 = arith.addf %22, %24 : vector<8x256xf32>
    %c0_8 = arith.constant 0 : index
    %c0_9 = arith.constant 0 : index
    %26 = vector.load %arg5[%c0_8, %c0_9] : memref<1x256xf32, #tpu.memory_space<vmem>>, vector<1x256xf32>
    %27 = vector.broadcast %26 : vector<1x256xf32> to vector<8x256xf32>
    %28 = arith.mulf %25, %27 : vector<8x256xf32>
    %c0_10 = arith.constant 0 : index
    %c0_11 = arith.constant 0 : index
    %29 = vector.load %arg6[%c0_10, %c0_11] : memref<1x256xf32, #tpu.memory_space<vmem>>, vector<1x256xf32>
    %30 = vector.broadcast %29 : vector<1x256xf32> to vector<8x256xf32>
    %31 = arith.addf %28, %30 : vector<8x256xf32>
    %cst_12 = arith.constant 0.000000e+00 : f32
    %32 = vector.broadcast %cst_12 : f32 to vector<8x256xf32>
    %33 = arith.maximumf %31, %32 : vector<8x256xf32>
    %34 = arith.truncf %33 : vector<8x256xf32> to vector<8x256xbf16>
    %c0_13 = arith.constant 0 : index
    %c0_14 = arith.constant 0 : index
    %35 = vector.load %arg7[%c0_13, %c0_14] : memref<256x128xbf16, #tpu.memory_space<vmem>>, vector<256x128xbf16>
    %cst_15 = arith.constant dense<0.000000e+00> : vector<8x128xf32>
    %36 = tpu.matmul %34, %35, %cst_15 {dimension_numbers = #tpu.dot_dimension_numbers<[1], [0], [0], [1], [0, 0, 1, 1], [], []>} : vector<8x256xbf16>, vector<256x128xbf16>, vector<8x128xf32> -> vector<8x128xf32>
    %c0_16 = arith.constant 0 : index
    %c0_17 = arith.constant 0 : index
    %37 = vector.load %arg8[%c0_16, %c0_17] : memref<1x128xf32, #tpu.memory_space<vmem>>, vector<1x128xf32>
    %38 = vector.broadcast %37 : vector<1x128xf32> to vector<8x128xf32>
    %39 = arith.mulf %36, %38 : vector<8x128xf32>
    %c0_18 = arith.constant 0 : index
    %c0_19 = arith.constant 0 : index
    %40 = vector.load %arg9[%c0_18, %c0_19] : memref<1x128xf32, #tpu.memory_space<vmem>>, vector<1x128xf32>
    %41 = vector.broadcast %40 : vector<1x128xf32> to vector<8x128xf32>
    %42 = arith.addf %39, %41 : vector<8x128xf32>
    %cst_20 = arith.constant 0.000000e+00 : f32
    %43 = vector.broadcast %cst_20 : f32 to vector<8x128xf32>
    %44 = arith.maximumf %42, %43 : vector<8x128xf32>
    %45 = arith.truncf %44 : vector<8x128xf32> to vector<8x128xbf16>
    %c0_21 = arith.constant 0 : index
    %c0_22 = arith.constant 0 : index
    %46 = vector.load %arg10[%c0_21, %c0_22] : memref<128x128xbf16, #tpu.memory_space<vmem>>, vector<128x128xbf16>
    %cst_23 = arith.constant dense<0.000000e+00> : vector<8x128xf32>
    %47 = tpu.matmul %45, %46, %cst_23 {dimension_numbers = #tpu.dot_dimension_numbers<[1], [0], [0], [1], [0, 0, 1, 1], [], []>} : vector<8x128xbf16>, vector<128x128xbf16>, vector<8x128xf32> -> vector<8x128xf32>
    %c0_24 = arith.constant 0 : index
    %c0_25 = arith.constant 0 : index
    %48 = vector.load %arg11[%c0_24, %c0_25] : memref<1x128xf32, #tpu.memory_space<vmem>>, vector<1x128xf32>
    %49 = vector.broadcast %48 : vector<1x128xf32> to vector<8x128xf32>
    %50 = arith.addf %47, %49 : vector<8x128xf32>
    %cst_26 = arith.constant 0.000000e+00 : f32
    %cst_27 = arith.constant 1.000000e+00 : f32
    %51 = vector.broadcast %cst_26 : f32 to vector<8x128xf32>
    %52 = arith.maximumf %51, %50 : vector<8x128xf32>
    %53 = vector.broadcast %cst_27 : f32 to vector<8x128xf32>
    %54 = arith.minimumf %53, %52 : vector<8x128xf32>
    %c0_28 = arith.constant 0 : index
    %c0_29 = arith.constant 0 : index
    %55 = vector.load %arg12[%c0_28, %c0_29] : memref<8x128xf32, #tpu.memory_space<vmem>>, vector<8x128xf32>
    tpu.vector_store %arg12[%c0_28, %c0_29], %54 {strides = array<i32>} : memref<8x128xf32, #tpu.memory_space<vmem>>, vector<8x128xf32>,
    return
  }
  func.func @transform_0(%arg0: i32) -> (i32, i32) {
    %c0_i32 = arith.constant 0 : i32
    %c0_i32_0 = arith.constant 0 : i32
    return %arg0, %c0_i32 : i32, i32
  }
  func.func @transform_1(%arg0: i32) -> (i32, i32) {
    %c0_i32 = arith.constant 0 : i32
    %c0_i32_0 = arith.constant 0 : i32
    return %arg0, %c0_i32 : i32, i32
  }
  func.func @transform_2(%arg0: i32) -> (i32, i32) {
    %c0_i32 = arith.constant 0 : i32
    %c0_i32_0 = arith.constant 0 : i32
    %c0_i32_1 = arith.constant 0 : i32
    return %c0_i32, %c0_i32_0 : i32, i32
  }
  func.func @transform_3(%arg0: i32) -> (i32, i32) {
    %c0_i32 = arith.constant 0 : i32
    %c0_i32_0 = arith.constant 0 : i32
    %c0_i32_1 = arith.constant 0 : i32
    return %c0_i32, %c0_i32_0 : i32, i32
  }
  func.func @transform_4(%arg0: i32) -> (i32, i32) {
    %c0_i32 = arith.constant 0 : i32
    %c0_i32_0 = arith.constant 0 : i32
    %c0_i32_1 = arith.constant 0 : i32
    return %c0_i32, %c0_i32_0 : i32, i32
  }
  func.func @transform_5(%arg0: i32) -> (i32, i32) {
    %c0_i32 = arith.constant 0 : i32
    %c0_i32_0 = arith.constant 0 : i32
    %c0_i32_1 = arith.constant 0 : i32
    return %c0_i32, %c0_i32_0 : i32, i32
  }
  func.func @transform_6(%arg0: i32) -> (i32, i32) {
    %c0_i32 = arith.constant 0 : i32
    %c0_i32_0 = arith.constant 0 : i32
    %c0_i32_1 = arith.constant 0 : i32
    return %c0_i32, %c0_i32_0 : i32, i32
  }
  func.func @transform_7(%arg0: i32) -> (i32, i32) {
    %c0_i32 = arith.constant 0 : i32
    %c0_i32_0 = arith.constant 0 : i32
    %c0_i32_1 = arith.constant 0 : i32
    return %c0_i32, %c0_i32_0 : i32, i32
  }
  func.func @transform_8(%arg0: i32) -> (i32, i32) {
    %c0_i32 = arith.constant 0 : i32
    %c0_i32_0 = arith.constant 0 : i32
    %c0_i32_1 = arith.constant 0 : i32
    return %c0_i32, %c0_i32_0 : i32, i32
  }
  func.func @transform_9(%arg0: i32) -> (i32, i32) {
    %c0_i32 = arith.constant 0 : i32
    %c0_i32_0 = arith.constant 0 : i32
    %c0_i32_1 = arith.constant 0 : i32
    return %c0_i32, %c0_i32_0 : i32, i32
  }
  func.func @transform_10(%arg0: i32) -> (i32, i32) {
    %c0_i32 = arith.constant 0 : i32
    %c0_i32_0 = arith.constant 0 : i32
    %c0_i32_1 = arith.constant 0 : i32
    return %c0_i32, %c0_i32_0 : i32, i32
  }
  func.func @transform_11(%arg0: i32) -> (i32, i32) {
    %c0_i32 = arith.constant 0 : i32
    %c0_i32_0 = arith.constant 0 : i32
    return %arg0, %c0_i32 : i32, i32
  }
}

</mosaic_0001>

<llo_original>
// kernel: tpu_custom_call.1
$region0: #{tpu_custom_call.1}
  #allocation0 [shape = 'u32[]', space=smem, size = 0x4, offset = 0x4, fixed_abs, tag = 'smem constant byte address 0x4 - core index']
  #allocation1 [shape = 'u32[144,128]{1,0:T(1,128)}', space=vmem, size = 0x12000, scoped, tag = 'internal scratch']
  %s0 = inlined_call_operand.vmem [shape: s32[8,3], index: 0, kind: input, shape index: {}]
  %s1 = inlined_call_operand.vmem [shape: bf16[8,128], index: 1, kind: input, shape index: {}]
  %s2 = inlined_call_operand.hbm [shape: bf16[128,256], index: 2, kind: input, shape index: {}]
  %s3 = inlined_call_operand.hbm [shape: bf16[128,256], index: 3, kind: input, shape index: {}]
  %s4 = inlined_call_operand.vmem [shape: f32[1,256], index: 4, kind: input, shape index: {}]
  %s5 = inlined_call_operand.vmem [shape: f32[1,256], index: 5, kind: input, shape index: {}]
  %s6 = inlined_call_operand.hbm [shape: bf16[256,128], index: 6, kind: input, shape index: {}]
  %s7 = inlined_call_operand.vmem [shape: f32[1,128], index: 7, kind: input, shape index: {}]
  %s8 = inlined_call_operand.vmem [shape: f32[1,128], index: 8, kind: input, shape index: {}]
  %s9 = inlined_call_operand.hbm [shape: bf16[128,128], index: 9, kind: input, shape index: {}]
  %s10 = inlined_call_operand.vmem [shape: f32[1,128], index: 10, kind: input, shape index: {}]
  %s11 = inlined_call_operand.hbm [shape: f32[8,128], index: 11, kind: output, shape index: {}]
  %s12 = sld [smem:[#allocation0]]
  $region70: #{tpu_custom_call.1} parent=0
    _
  %s14 = ssub.s32 1, %s12
  %s15 = scalar_select 0, %s14, %s12
  $region1: #{tpu_custom_call.1} parent=0
    #allocation2 [shape = 'u8[65536]{0}', space=vmem, size = 0x10000, scoped, tag = 'input window, operand 2, single buffered']
    #allocation3 [shape = 's32[1]{0}', space=sflag, size = 0x4, scoped, tag = 'scoped memory for tpu_custom_call.1']
    #allocation4 [shape = 's32[1]{0}', space=sflag, size = 0x4, scoped, tag = 'scoped memory for tpu_custom_call.1']
    #allocation5 [shape = 'u8[65536]{0}', space=vmem, size = 0x10000, scoped, tag = 'input window, operand 3, single buffered']
    #allocation6 [shape = 's32[1]{0}', space=sflag, size = 0x4, scoped, tag = 'scoped memory for tpu_custom_call.1']
    #allocation7 [shape = 'u8[65536]{0}', space=vmem, size = 0x10000, scoped, tag = 'input window, operand 6, single buffered']
    #allocation8 [shape = 'u8[32768]{0}', space=vmem, size = 0x8000, scoped, tag = 'input window, operand 9, single buffered']
    #allocation9 [shape = 's32[1]{0}', space=sflag, size = 0x4, scoped, tag = 'scoped memory for tpu_custom_call.1']
    #allocation10 [shape = 'u8[4096]{0}', space=vmem, size = 0x1000, scoped, tag = 'output window, operand 0, single buffered']
    %16 = vsyncpa [#allocation3], 0
    %17 = vsyncpa [#allocation6], 0
    %18 = vsyncpa [#allocation9], 0
    %19 = vsyncpa [#allocation4], 0
    // Predicated region
    $region2: #{tpu_custom_call.1} parent=1 // pred_check
      _
    $region3: #{tpu_custom_call.1} parent=1 // pred_check_branch
      %21 = sbr.rel (0) target = $region5
    $region4: #{tpu_custom_call.1} parent=1 // pred_region
      _
    $region5: #{tpu_custom_call.1} parent=1 // pred_fallthru
      _
    // Predicated region
    $region6: #{tpu_custom_call.1} parent=1 // pred_check
      _
    $region7: #{tpu_custom_call.1} parent=1 // pred_check_branch
      %23 = sbr.rel (0) target = $region9
    $region8: #{tpu_custom_call.1} parent=1 // pred_region
      _
    $region9: #{tpu_custom_call.1} parent=1 // pred_fallthru
      _
    // Predicated region
    $region10: #{tpu_custom_call.1} parent=1 // pred_check
      _
    $region11: #{tpu_custom_call.1} parent=1 // pred_check_branch
      %25 = sbr.rel (0) target = $region13
    $region12: #{tpu_custom_call.1} parent=1 // pred_region
      %s27 = ssub.s32 2048, 2048
      %28 = vsyncadd [#allocation3], %s27
      %s29 = sshll.u32 [#allocation2], 4
      %s30 = int_to_ptr.vmem [resolvable:$true] %s29
      %35 = dma.hbm_to_vmem [thread:$0]  %s2, 2048, %s30, [#allocation3], 128, 128, 8
    $region13: #{tpu_custom_call.1} parent=1 // pred_fallthru
      _
    // Predicated region
    $region14: #{tpu_custom_call.1} parent=1 // pred_check
      _
    $region15: #{tpu_custom_call.1} parent=1 // pred_check_branch
      %37 = sbr.rel (0) target = $region17
    $region16: #{tpu_custom_call.1} parent=1 // pred_region
      %s39 = ssub.s32 2048, 2048
      %40 = vsyncadd [#allocation6], %s39
      %s41 = sshll.u32 [#allocation5], 4
      %s42 = int_to_ptr.vmem [resolvable:$true] %s41
      %47 = dma.hbm_to_vmem [thread:$0]  %s3, 2048, %s42, [#allocation6], 128, 128, 8
    $region17: #{tpu_custom_call.1} parent=1 // pred_fallthru
      _
    // Predicated region
    $region18: #{tpu_custom_call.1} parent=1 // pred_check
      _
    $region19: #{tpu_custom_call.1} parent=1 // pred_check_branch
      %49 = sbr.rel (0) target = $region21
    $region20: #{tpu_custom_call.1} parent=1 // pred_region
      _
    $region21: #{tpu_custom_call.1} parent=1 // pred_fallthru
      _
    // Predicated region
    $region22: #{tpu_custom_call.1} parent=1 // pred_check
      _
    $region23: #{tpu_custom_call.1} parent=1 // pred_check_branch
      %51 = sbr.rel (0) target = $region25
    $region24: #{tpu_custom_call.1} parent=1 // pred_region
      _
    $region25: #{tpu_custom_call.1} parent=1 // pred_fallthru
      _
    // Predicated region
    $region26: #{tpu_custom_call.1} parent=1 // pred_check
      _
    $region27: #{tpu_custom_call.1} parent=1 // pred_check_branch
      %53 = sbr.rel (0) target = $region29
    $region28: #{tpu_custom_call.1} parent=1 // pred_region
      %s55 = ssub.s32 2048, 2048
      %56 = vsyncadd [#allocation6], %s55
      %s57 = sshll.u32 [#allocation7], 4
      %s58 = int_to_ptr.vmem [resolvable:$true] %s57
      %63 = dma.hbm_to_vmem [thread:$0]  %s6, 2048, %s58, [#allocation6], 64, 64, 4
    $region29: #{tpu_custom_call.1} parent=1 // pred_fallthru
      _
    // Predicated region
    $region30: #{tpu_custom_call.1} parent=1 // pred_check
      _
    $region31: #{tpu_custom_call.1} parent=1 // pred_check_branch
      %65 = sbr.rel (0) target = $region33
    $region32: #{tpu_custom_call.1} parent=1 // pred_region
      _
    $region33: #{tpu_custom_call.1} parent=1 // pred_fallthru
      _
    // Predicated region
    $region34: #{tpu_custom_call.1} parent=1 // pred_check
      _
    $region35: #{tpu_custom_call.1} parent=1 // pred_check_branch
      %67 = sbr.rel (0) target = $region37
    $region36: #{tpu_custom_call.1} parent=1 // pred_region
      _
    $region37: #{tpu_custom_call.1} parent=1 // pred_fallthru
      _
    // Predicated region
    $region38: #{tpu_custom_call.1} parent=1 // pred_check
      _
    $region39: #{tpu_custom_call.1} parent=1 // pred_check_branch
      %69 = sbr.rel (0) target = $region41
    $region40: #{tpu_custom_call.1} parent=1 // pred_region
      %s71 = ssub.s32 1024, 1024
      %72 = vsyncadd [#allocation9], %s71
      %s73 = sshll.u32 [#allocation8], 4
      %s74 = int_to_ptr.vmem [resolvable:$true] %s73
      %79 = dma.hbm_to_vmem [thread:$0]  %s9, 1024, %s74, [#allocation9], 64, 64, 4
    $region41: #{tpu_custom_call.1} parent=1 // pred_fallthru
      _
    // Predicated region
    $region42: #{tpu_custom_call.1} parent=1 // pred_check
      _
    $region43: #{tpu_custom_call.1} parent=1 // pred_check_branch
      %81 = sbr.rel (0) target = $region45
    $region44: #{tpu_custom_call.1} parent=1 // pred_region
      _
    $region45: #{tpu_custom_call.1} parent=1 // pred_fallthru
      _
    // Predicated region
    $region46: #{tpu_custom_call.1} parent=1 // pred_check
      _
    $region47: #{tpu_custom_call.1} parent=1 // pred_check_branch
      %83 = sbr.rel (0) target = $region49
    $region48: #{tpu_custom_call.1} parent=1 // pred_region
      %84 = dma.done [#allocation3], 2048
    $region49: #{tpu_custom_call.1} parent=1 // pred_fallthru
      _
    // Predicated region
    $region50: #{tpu_custom_call.1} parent=1 // pred_check
      _
    $region51: #{tpu_custom_call.1} parent=1 // pred_check_branch
      %86 = sbr.rel (0) target = $region53
    $region52: #{tpu_custom_call.1} parent=1 // pred_region
      %87 = dma.done [#allocation6], 2048
    $region53: #{tpu_custom_call.1} parent=1 // pred_fallthru
      _
    // Predicated region
    $region54: #{tpu_custom_call.1} parent=1 // pred_check
      _
    $region55: #{tpu_custom_call.1} parent=1 // pred_check_branch
      %89 = sbr.rel (0) target = $region57
    $region56: #{tpu_custom_call.1} parent=1 // pred_region
      %90 = dma.done [#allocation6], 2048
    $region57: #{tpu_custom_call.1} parent=1 // pred_fallthru
      _
    // Predicated region
    $region58: #{tpu_custom_call.1} parent=1 // pred_check
      _
    $region59: #{tpu_custom_call.1} parent=1 // pred_check_branch
      %92 = sbr.rel (0) target = $region61
    $region60: #{tpu_custom_call.1} parent=1 // pred_region
      %93 = dma.done [#allocation9], 1024
    $region61: #{tpu_custom_call.1} parent=1 // pred_fallthru
      _
    %v95 = vld [vmem:[%s1] sm:$0xf]
    %v96 = vld [vmem:[%s0] sm:$0xff]
    %v97 = vlaneseq
    %v98 = vand.u32 %v97, 127
    %99 = vset.pattern.permute.xlu0 0
    %100 = vperm.xlu0 %99, %v96
    %v101 = vpop.permute.xlu0 %100
    %vm102 = vcmp.eq.s32.totalorder %v98, %v101
    %v103 = vsel %vm102, 1, 0
    %v104 = vcvt.s32.f32 %v103
    %105 = vset.pattern.permute.xlu0 1
    %106 = vperm.xlu0 %105, %v96
    %v107 = vpop.permute.xlu0 %106
    %vm108 = vcmp.eq.s32.totalorder %v98, %v107
    %v109 = vsel %vm108, 1, 0
    %v110 = vcvt.s32.f32 %v109
    %v111 = vadd.f32 %v104, %v110
    %112 = vset.pattern.permute.xlu0 2
    %113 = vperm.xlu0 %112, %v96
    %v114 = vpop.permute.xlu0 %113
    %vm115 = vcmp.eq.s32.totalorder %v98, %v114
    %v116 = vsel %vm115, 1, 0
    %v117 = vcvt.s32.f32 %v116
    %v118 = vadd.f32 %v111, %v117
    %v119 = vpack.c.bf16 %v118, %v118
    %v120 = vld [vmem:[#allocation2] sm:$0xff]
    %v121 = vld [vmem:[#allocation2 + $0x8] sm:$0xff]
    %v122 = vld [vmem:[#allocation2 + $0x10] sm:$0xff]
    %v123 = vld [vmem:[#allocation2 + $0x18] sm:$0xff]
    %v124 = vld [vmem:[#allocation2 + $0x20] sm:$0xff]
    %v125 = vld [vmem:[#allocation2 + $0x28] sm:$0xff]
    %v126 = vld [vmem:[#allocation2 + $0x30] sm:$0xff]
    %v127 = vld [vmem:[#allocation2 + $0x38] sm:$0xff]
    %v128 = vld [vmem:[#allocation2 + $0x40] sm:$0xff]
    %v129 = vld [vmem:[#allocation2 + $0x48] sm:$0xff]
    %v130 = vld [vmem:[#allocation2 + $0x50] sm:$0xff]
    %v131 = vld [vmem:[#allocation2 + $0x58] sm:$0xff]
    %v132 = vld [vmem:[#allocation2 + $0x60] sm:$0xff]
    %v133 = vld [vmem:[#allocation2 + $0x68] sm:$0xff]
    %v134 = vld [vmem:[#allocation2 + $0x70] sm:$0xff]
    %v135 = vld [vmem:[#allocation2 + $0x78] sm:$0xff]
    %v136 = vld [vmem:[#allocation5] sm:$0xff]
    %v137 = vld [vmem:[#allocation5 + $0x8] sm:$0xff]
    %v138 = vld [vmem:[#allocation5 + $0x10] sm:$0xff]
    %v139 = vld [vmem:[#allocation5 + $0x18] sm:$0xff]
    %v140 = vld [vmem:[#allocation5 + $0x20] sm:$0xff]
    %v141 = vld [vmem:[#allocation5 + $0x28] sm:$0xff]
    %v142 = vld [vmem:[#allocation5 + $0x30] sm:$0xff]
    %v143 = vld [vmem:[#allocation5 + $0x38] sm:$0xff]
    %v144 = vld [vmem:[#allocation5 + $0x40] sm:$0xff]
    %v145 = vld [vmem:[#allocation5 + $0x48] sm:$0xff]
    %v146 = vld [vmem:[#allocation5 + $0x50] sm:$0xff]
    %v147 = vld [vmem:[#allocation5 + $0x58] sm:$0xff]
    %v148 = vld [vmem:[#allocation5 + $0x60] sm:$0xff]
    %v149 = vld [vmem:[#allocation5 + $0x68] sm:$0xff]
    %v150 = vld [vmem:[#allocation5 + $0x70] sm:$0xff]
    %v151 = vld [vmem:[#allocation5 + $0x78] sm:$0xff]
    %v168 = vunpack.c.l.b16 %v136
    %v169 = vunpack.c.h.b16 %v136
    %v170 = vunpack.c.l.b16 %v137
    %v171 = vunpack.c.h.b16 %v137
    %v172 = vunpack.c.l.b16 %v138
    %v173 = vunpack.c.h.b16 %v138
    %v174 = vunpack.c.l.b16 %v139
    %v175 = vunpack.c.h.b16 %v139
    %v176 = vunpack.c.l.b16 %v140
    %v177 = vunpack.c.h.b16 %v140
    %v178 = vunpack.c.l.b16 %v141
    %v179 = vunpack.c.h.b16 %v141
    %v180 = vunpack.c.l.b16 %v142
    %v181 = vunpack.c.h.b16 %v142
    %v182 = vunpack.c.l.b16 %v143
    %v183 = vunpack.c.h.b16 %v143
    %v184 = vunpack.c.l.b16 %v144
    %v185 = vunpack.c.h.b16 %v144
    %v186 = vunpack.c.l.b16 %v145
    %v187 = vunpack.c.h.b16 %v145
    %v188 = vunpack.c.l.b16 %v146
    %v189 = vunpack.c.h.b16 %v146
    %v190 = vunpack.c.l.b16 %v147
    %v191 = vunpack.c.h.b16 %v147
    %v192 = vunpack.c.l.b16 %v148
    %v193 = vunpack.c.h.b16 %v148
    %v194 = vunpack.c.l.b16 %v149
    %v195 = vunpack.c.h.b16 %v149
    %v196 = vunpack.c.l.b16 %v150
    %v197 = vunpack.c.h.b16 %v150
    %v198 = vunpack.c.l.b16 %v151
    %v199 = vunpack.c.h.b16 %v151
    %v200 = vpack.c.b16 %v170, %v168
    %v201 = vpack.c.b16 %v171, %v169
    %v202 = vpack.c.b16 %v174, %v172
    %v203 = vpack.c.b16 %v175, %v173
    %v204 = vpack.c.b16 %v178, %v176
    %v205 = vpack.c.b16 %v179, %v177
    %v206 = vpack.c.b16 %v182, %v180
    %v207 = vpack.c.b16 %v183, %v181
    %v208 = vpack.c.b16 %v186, %v184
    %v209 = vpack.c.b16 %v187, %v185
    %v210 = vpack.c.b16 %v190, %v188
    %v211 = vpack.c.b16 %v191, %v189
    %v212 = vpack.c.b16 %v194, %v192
    %v213 = vpack.c.b16 %v195, %v193
    %v214 = vpack.c.b16 %v198, %v196
    %v215 = vpack.c.b16 %v199, %v197
    %232 = vmatprep.subr.bf16.mxu0 %v215
    %233 = vmatpush1.bf16.msra.mxu0 %v214
    %234 = vmatprep.subr.bf16.mxu0 %v213
    %235 = vmatpush1.bf16.msra.mxu0 %v212
    %236 = vmatprep.subr.bf16.mxu0 %v211
    %237 = vmatpush1.bf16.msra.mxu0 %v210
    %238 = vmatprep.subr.bf16.mxu0 %v209
    %239 = vmatpush1.bf16.msra.mxu0 %v208
    %240 = vmatprep.subr.bf16.mxu0 %v207
    %241 = vmatpush1.bf16.msra.mxu0 %v206
    %242 = vmatprep.subr.bf16.mxu0 %v205
    %243 = vmatpush1.bf16.msra.mxu0 %v204
    %244 = vmatprep.subr.bf16.mxu0 %v203
    %245 = vmatpush1.bf16.msra.mxu0 %v202
    %246 = vmatprep.subr.bf16.mxu0 %v201
    %247 = vmatpush1.bf16.msra.mxu0 %v200
    %248 = vmatprep.subr.bf16.mxu0 0
    %249 = vmatpush2.bf16.msra.mxu0 0
    %250 = vmatprep.subr.bf16.mxu0 0
    %251 = vmatpush2.bf16.msra.mxu0 0
    %252 = vmatprep.subr.bf16.mxu0 0
    %253 = vmatpush2.bf16.msra.mxu0 0
    %254 = vmatprep.subr.bf16.mxu0 0
    %255 = vmatpush2.bf16.msra.mxu0 0
    %256 = vmatprep.subr.bf16.mxu0 0
    %257 = vmatpush2.bf16.msra.mxu0 0
    %258 = vmatprep.subr.bf16.mxu0 0
    %259 = vmatpush2.bf16.msra.mxu0 0
    %260 = vmatprep.subr.bf16.mxu0 0
    %261 = vmatpush2.bf16.msra.mxu0 0
    %262 = vmatprep.subr.bf16.mxu0 0
    %263 = vmatpush2.bf16.msra.mxu0 0
    %264 = vmatprep.mubr.bf16.mxu0 0
    %265 = vmatmul.mubr.bf16.gmra.mxu0 %v119
    %v266 = vpop.f32.mrf.mxu0
    %v267 = vadd.f32 0.0, %v266
    %v268 = vpop.f32.mrf.mxu0
    %v269 = vadd.f32 0.0, %v268
    %v270 = vpop.f32.mrf.mxu0
    %v271 = vpop.f32.mrf.mxu0
    %272 = vdwg.mxu0
    %v289 = vunpack.c.l.b16 %v120
    %v290 = vunpack.c.h.b16 %v120
    %v291 = vunpack.c.l.b16 %v121
    %v292 = vunpack.c.h.b16 %v121
    %v293 = vunpack.c.l.b16 %v122
    %v294 = vunpack.c.h.b16 %v122
    %v295 = vunpack.c.l.b16 %v123
    %v296 = vunpack.c.h.b16 %v123
    %v297 = vunpack.c.l.b16 %v124
    %v298 = vunpack.c.h.b16 %v124
    %v299 = vunpack.c.l.b16 %v125
    %v300 = vunpack.c.h.b16 %v125
    %v301 = vunpack.c.l.b16 %v126
    %v302 = vunpack.c.h.b16 %v126
    %v303 = vunpack.c.l.b16 %v127
    %v304 = vunpack.c.h.b16 %v127
    %v305 = vunpack.c.l.b16 %v128
    %v306 = vunpack.c.h.b16 %v128
    %v307 = vunpack.c.l.b16 %v129
    %v308 = vunpack.c.h.b16 %v129
    %v309 = vunpack.c.l.b16 %v130
    %v310 = vunpack.c.h.b16 %v130
    %v311 = vunpack.c.l.b16 %v131
    %v312 = vunpack.c.h.b16 %v131
    %v313 = vunpack.c.l.b16 %v132
    %v314 = vunpack.c.h.b16 %v132
    %v315 = vunpack.c.l.b16 %v133
    %v316 = vunpack.c.h.b16 %v133
    %v317 = vunpack.c.l.b16 %v134
    %v318 = vunpack.c.h.b16 %v134
    %v319 = vunpack.c.l.b16 %v135
    %v320 = vunpack.c.h.b16 %v135
    %v321 = vpack.c.b16 %v291, %v289
    %v322 = vpack.c.b16 %v292, %v290
    %v323 = vpack.c.b16 %v295, %v293
    %v324 = vpack.c.b16 %v296, %v294
    %v325 = vpack.c.b16 %v299, %v297
    %v326 = vpack.c.b16 %v300, %v298
    %v327 = vpack.c.b16 %v303, %v301
    %v328 = vpack.c.b16 %v304, %v302
    %v329 = vpack.c.b16 %v307, %v305
    %v330 = vpack.c.b16 %v308, %v306
    %v331 = vpack.c.b16 %v311, %v309
    %v332 = vpack.c.b16 %v312, %v310
    %v333 = vpack.c.b16 %v315, %v313
    %v334 = vpack.c.b16 %v316, %v314
    %v335 = vpack.c.b16 %v319, %v317
    %v336 = vpack.c.b16 %v320, %v318
    %353 = vmatprep.subr.bf16.mxu0 %v336
    %354 = vmatpush1.bf16.msra.mxu0 %v335
    %355 = vmatprep.subr.bf16.mxu0 %v334
    %356 = vmatpush1.bf16.msra.mxu0 %v333
    %357 = vmatprep.subr.bf16.mxu0 %v332
    %358 = vmatpush1.bf16.msra.mxu0 %v331
    %359 = vmatprep.subr.bf16.mxu0 %v330
    %360 = vmatpush1.bf16.msra.mxu0 %v329
    %361 = vmatprep.subr.bf16.mxu0 %v328
    %362 = vmatpush1.bf16.msra.mxu0 %v327
    %363 = vmatprep.subr.bf16.mxu0 %v326
    %364 = vmatpush1.bf16.msra.mxu0 %v325
    %365 = vmatprep.subr.bf16.mxu0 %v324
    %366 = vmatpush1.bf16.msra.mxu0 %v323
    %367 = vmatprep.subr.bf16.mxu0 %v322
    %368 = vmatpush1.bf16.msra.mxu0 %v321
    %369 = vmatprep.subr.bf16.mxu0 0
    %370 = vmatpush2.bf16.msra.mxu0 0
    %371 = vmatprep.subr.bf16.mxu0 0
    %372 = vmatpush2.bf16.msra.mxu0 0
    %373 = vmatprep.subr.bf16.mxu0 0
    %374 = vmatpush2.bf16.msra.mxu0 0
    %375 = vmatprep.subr.bf16.mxu0 0
    %376 = vmatpush2.bf16.msra.mxu0 0
    %377 = vmatprep.subr.bf16.mxu0 0
    %378 = vmatpush2.bf16.msra.mxu0 0
    %379 = vmatprep.subr.bf16.mxu0 0
    %380 = vmatpush2.bf16.msra.mxu0 0
    %381 = vmatprep.subr.bf16.mxu0 0
    %382 = vmatpush2.bf16.msra.mxu0 0
    %383 = vmatprep.subr.bf16.mxu0 0
    %384 = vmatpush2.bf16.msra.mxu0 0
    %385 = vmatprep.mubr.bf16.mxu0 0
    %386 = vmatmul.mubr.bf16.gmra.mxu0 %v95
    %v387 = vpop.f32.mrf.mxu0
    %v388 = vadd.f32 %v267, %v387
    %v389 = vpop.f32.mrf.mxu0
    %v390 = vadd.f32 %v269, %v389
    %v391 = vpop.f32.mrf.mxu0
    %v392 = vpop.f32.mrf.mxu0
    %393 = vdwg.mxu0
    %v394 = vld [vmem:[%s4] sm:$0x3]
    %v396 = vlaneseq
    %v397 = vshrl.u32 %v396, 7
    %v398 = vsub.s32 0, %v397
    %v399 = vrot.slane %v394, %v398
    %v400 = vlaneseq
    %v401 = vshrl.u32 %v400, 7
    %v402 = vsub.s32 1, %v401
    %v403 = vrot.slane %v394, %v402
    %v406 = vmul.f32 %v388, %v399
    %v407 = vmul.f32 %v390, %v403
    %v408 = vld [vmem:[%s5] sm:$0x3]
    %v410 = vlaneseq
    %v411 = vshrl.u32 %v410, 7
    %v412 = vsub.s32 0, %v411
    %v413 = vrot.slane %v408, %v412
    %v414 = vlaneseq
    %v415 = vshrl.u32 %v414, 7
    %v416 = vsub.s32 1, %v415
    %v417 = vrot.slane %v408, %v416
    %v420 = vadd.f32 %v406, %v413
    %v421 = vadd.f32 %v407, %v417
    %v422 = vmax.f32 %v420, 0.0
    %v423 = vmax.f32 %v421, 0.0
    %v424 = vpack.c.bf16 %v422, %v422
    %v425 = vpack.c.bf16 %v423, %v423
    %v426 = vld [vmem:[#allocation7] sm:$0xf]
    %v427 = vld [vmem:[#allocation7 + $0x4] sm:$0xf]
    %v428 = vld [vmem:[#allocation7 + $0x8] sm:$0xf]
    %v429 = vld [vmem:[#allocation7 + $0xc] sm:$0xf]
    %v430 = vld [vmem:[#allocation7 + $0x10] sm:$0xf]
    %v431 = vld [vmem:[#allocation7 + $0x14] sm:$0xf]
    %v432 = vld [vmem:[#allocation7 + $0x18] sm:$0xf]
    %v433 = vld [vmem:[#allocation7 + $0x1c] sm:$0xf]
    %v434 = vld [vmem:[#allocation7 + $0x20] sm:$0xf]
    %v435 = vld [vmem:[#allocation7 + $0x24] sm:$0xf]
    %v436 = vld [vmem:[#allocation7 + $0x28] sm:$0xf]
    %v437 = vld [vmem:[#allocation7 + $0x2c] sm:$0xf]
    %v438 = vld [vmem:[#allocation7 + $0x30] sm:$0xf]
    %v439 = vld [vmem:[#allocation7 + $0x34] sm:$0xf]
    %v440 = vld [vmem:[#allocation7 + $0x38] sm:$0xf]
    %v441 = vld [vmem:[#allocation7 + $0x3c] sm:$0xf]
    %v442 = vld [vmem:[#allocation7 + $0x40] sm:$0xf]
    %v443 = vld [vmem:[#allocation7 + $0x44] sm:$0xf]
    %v444 = vld [vmem:[#allocation7 + $0x48] sm:$0xf]
    %v445 = vld [vmem:[#allocation7 + $0x4c] sm:$0xf]
    %v446 = vld [vmem:[#allocation7 + $0x50] sm:$0xf]
    %v447 = vld [vmem:[#allocation7 + $0x54] sm:$0xf]
    %v448 = vld [vmem:[#allocation7 + $0x58] sm:$0xf]
    %v449 = vld [vmem:[#allocation7 + $0x5c] sm:$0xf]
    %v450 = vld [vmem:[#allocation7 + $0x60] sm:$0xf]
    %v451 = vld [vmem:[#allocation7 + $0x64] sm:$0xf]
    %v452 = vld [vmem:[#allocation7 + $0x68] sm:$0xf]
    %v453 = vld [vmem:[#allocation7 + $0x6c] sm:$0xf]
    %v454 = vld [vmem:[#allocation7 + $0x70] sm:$0xf]
    %v455 = vld [vmem:[#allocation7 + $0x74] sm:$0xf]
    %v456 = vld [vmem:[#allocation7 + $0x78] sm:$0xf]
    %v457 = vld [vmem:[#allocation7 + $0x7c] sm:$0xf]
    %v490 = vunpack.c.l.b16 %v426
    %v491 = vunpack.c.l.b16 %v427
    %v492 = vunpack.c.l.b16 %v428
    %v493 = vunpack.c.l.b16 %v429
    %v494 = vunpack.c.l.b16 %v430
    %v495 = vunpack.c.l.b16 %v431
    %v496 = vunpack.c.l.b16 %v432
    %v497 = vunpack.c.l.b16 %v433
    %v498 = vunpack.c.l.b16 %v434
    %v499 = vunpack.c.l.b16 %v435
    %v500 = vunpack.c.l.b16 %v436
    %v501 = vunpack.c.l.b16 %v437
    %v502 = vunpack.c.l.b16 %v438
    %v503 = vunpack.c.l.b16 %v439
    %v504 = vunpack.c.l.b16 %v440
    %v505 = vunpack.c.l.b16 %v441
    %v506 = vunpack.c.l.b16 %v442
    %v507 = vunpack.c.l.b16 %v443
    %v508 = vunpack.c.l.b16 %v444
    %v509 = vunpack.c.l.b16 %v445
    %v510 = vunpack.c.l.b16 %v446
    %v511 = vunpack.c.l.b16 %v447
    %v512 = vunpack.c.l.b16 %v448
    %v513 = vunpack.c.l.b16 %v449
    %v514 = vunpack.c.l.b16 %v450
    %v515 = vunpack.c.l.b16 %v451
    %v516 = vunpack.c.l.b16 %v452
    %v517 = vunpack.c.l.b16 %v453
    %v518 = vunpack.c.l.b16 %v454
    %v519 = vunpack.c.l.b16 %v455
    %v520 = vunpack.c.l.b16 %v456
    %v521 = vunpack.c.l.b16 %v457
    %v522 = vpack.c.b16 %v491, %v490
    %v523 = vpack.c.b16 %v493, %v492
    %v524 = vpack.c.b16 %v495, %v494
    %v525 = vpack.c.b16 %v497, %v496
    %v526 = vpack.c.b16 %v499, %v498
    %v527 = vpack.c.b16 %v501, %v500
    %v528 = vpack.c.b16 %v503, %v502
    %v529 = vpack.c.b16 %v505, %v504
    %v530 = vpack.c.b16 %v507, %v506
    %v531 = vpack.c.b16 %v509, %v508
    %v532 = vpack.c.b16 %v511, %v510
    %v533 = vpack.c.b16 %v513, %v512
    %v534 = vpack.c.b16 %v515, %v514
    %v535 = vpack.c.b16 %v517, %v516
    %v536 = vpack.c.b16 %v519, %v518
    %v537 = vpack.c.b16 %v521, %v520
    %554 = vmatprep.subr.bf16.mxu0 0
    %555 = vmatpush1.bf16.msra.mxu0 %v529
    %556 = vmatprep.subr.bf16.mxu0 0
    %557 = vmatpush1.bf16.msra.mxu0 %v528
    %558 = vmatprep.subr.bf16.mxu0 0
    %559 = vmatpush1.bf16.msra.mxu0 %v527
    %560 = vmatprep.subr.bf16.mxu0 0
    %561 = vmatpush1.bf16.msra.mxu0 %v526
    %562 = vmatprep.subr.bf16.mxu0 0
    %563 = vmatpush1.bf16.msra.mxu0 %v525
    %564 = vmatprep.subr.bf16.mxu0 0
    %565 = vmatpush1.bf16.msra.mxu0 %v524
    %566 = vmatprep.subr.bf16.mxu0 0
    %567 = vmatpush1.bf16.msra.mxu0 %v523
    %568 = vmatprep.subr.bf16.mxu0 0
    %569 = vmatpush1.bf16.msra.mxu0 %v522
    %570 = vmatprep.subr.bf16.mxu0 0
    %571 = vmatpush2.bf16.msra.mxu0 %v537
    %572 = vmatprep.subr.bf16.mxu0 0
    %573 = vmatpush2.bf16.msra.mxu0 %v536
    %574 = vmatprep.subr.bf16.mxu0 0
    %575 = vmatpush2.bf16.msra.mxu0 %v535
    %576 = vmatprep.subr.bf16.mxu0 0
    %577 = vmatpush2.bf16.msra.mxu0 %v534
    %578 = vmatprep.subr.bf16.mxu0 0
    %579 = vmatpush2.bf16.msra.mxu0 %v533
    %580 = vmatprep.subr.bf16.mxu0 0
    %581 = vmatpush2.bf16.msra.mxu0 %v532
    %582 = vmatprep.subr.bf16.mxu0 0
    %583 = vmatpush2.bf16.msra.mxu0 %v531
    %584 = vmatprep.subr.bf16.mxu0 0
    %585 = vmatpush2.bf16.msra.mxu0 %v530
    %586 = vmatprep.mubr.bf16.mxu0 %v425
    %587 = vmatmul.mubr.bf16.gmra.mxu0 %v424
    %v588 = vpop.f32.mrf.mxu0
    %v589 = vadd.f32 0.0, %v588
    %v590 = vpop.f32.mrf.mxu0
    %v591 = vpop.f32.mrf.mxu0
    %v592 = vpop.f32.mrf.mxu0
    %593 = vdwg.mxu0
    %v594 = vld [vmem:[%s7] sm:$0x1]
    %v596 = vlaneseq
    %v597 = vshrl.u32 %v596, 7
    %v598 = vsub.s32 0, %v597
    %v599 = vrot.slane %v594, %v598
    %v601 = vmul.f32 %v589, %v599
    %v602 = vld [vmem:[%s8] sm:$0x1]
    %v604 = vlaneseq
    %v605 = vshrl.u32 %v604, 7
    %v606 = vsub.s32 0, %v605
    %v607 = vrot.slane %v602, %v606
    %v609 = vadd.f32 %v601, %v607
    %v610 = vmax.f32 %v609, 0.0
    %v611 = vpack.c.bf16 %v610, %v610
    %v612 = vld [vmem:[#allocation8] sm:$0xf]
    %v613 = vld [vmem:[#allocation8 + $0x4] sm:$0xf]
    %v614 = vld [vmem:[#allocation8 + $0x8] sm:$0xf]
    %v615 = vld [vmem:[#allocation8 + $0xc] sm:$0xf]
    %v616 = vld [vmem:[#allocation8 + $0x10] sm:$0xf]
    %v617 = vld [vmem:[#allocation8 + $0x14] sm:$0xf]
    %v618 = vld [vmem:[#allocation8 + $0x18] sm:$0xf]
    %v619 = vld [vmem:[#allocation8 + $0x1c] sm:$0xf]
    %v620 = vld [vmem:[#allocation8 + $0x20] sm:$0xf]
    %v621 = vld [vmem:[#allocation8 + $0x24] sm:$0xf]
    %v622 = vld [vmem:[#allocation8 + $0x28] sm:$0xf]
    %v623 = vld [vmem:[#allocation8 + $0x2c] sm:$0xf]
    %v624 = vld [vmem:[#allocation8 + $0x30] sm:$0xf]
    %v625 = vld [vmem:[#allocation8 + $0x34] sm:$0xf]
    %v626 = vld [vmem:[#allocation8 + $0x38] sm:$0xf]
    %v627 = vld [vmem:[#allocation8 + $0x3c] sm:$0xf]
    %v628 = vld [vmem:[%s10] sm:$0x1]
    %v630 = vlaneseq
    %v631 = vshrl.u32 %v630, 7
    %v632 = vsub.s32 0, %v631
    %v633 = vrot.slane %v628, %v632
    %v651 = vunpack.c.l.b16 %v612
    %v652 = vunpack.c.l.b16 %v613
    %v653 = vunpack.c.l.b16 %v614
    %v654 = vunpack.c.l.b16 %v615
    %v655 = vunpack.c.l.b16 %v616
    %v656 = vunpack.c.l.b16 %v617
    %v657 = vunpack.c.l.b16 %v618
    %v658 = vunpack.c.l.b16 %v619
    %v659 = vunpack.c.l.b16 %v620
    %v660 = vunpack.c.l.b16 %v621
    %v661 = vunpack.c.l.b16 %v622
    %v662 = vunpack.c.l.b16 %v623
    %v663 = vunpack.c.l.b16 %v624
    %v664 = vunpack.c.l.b16 %v625
    %v665 = vunpack.c.l.b16 %v626
    %v666 = vunpack.c.l.b16 %v627
    %v667 = vpack.c.b16 %v652, %v651
    %v668 = vpack.c.b16 %v654, %v653
    %v669 = vpack.c.b16 %v656, %v655
    %v670 = vpack.c.b16 %v658, %v657
    %v671 = vpack.c.b16 %v660, %v659
    %v672 = vpack.c.b16 %v662, %v661
    %v673 = vpack.c.b16 %v664, %v663
    %v674 = vpack.c.b16 %v666, %v665
    %683 = vmatprep.subr.bf16.mxu0 0
    %684 = vmatpush1.bf16.msra.mxu0 %v674
    %685 = vmatprep.subr.bf16.mxu0 0
    %686 = vmatpush1.bf16.msra.mxu0 %v673
    %687 = vmatprep.subr.bf16.mxu0 0
    %688 = vmatpush1.bf16.msra.mxu0 %v672
    %689 = vmatprep.subr.bf16.mxu0 0
    %690 = vmatpush1.bf16.msra.mxu0 %v671
    %691 = vmatprep.subr.bf16.mxu0 0
    %692 = vmatpush1.bf16.msra.mxu0 %v670
    %693 = vmatprep.subr.bf16.mxu0 0
    %694 = vmatpush1.bf16.msra.mxu0 %v669
    %695 = vmatprep.subr.bf16.mxu0 0
    %696 = vmatpush1.bf16.msra.mxu0 %v668
    %697 = vmatprep.subr.bf16.mxu0 0
    %698 = vmatpush1.bf16.msra.mxu0 %v667
    %699 = vmatprep.subr.bf16.mxu0 0
    %700 = vmatpush2.bf16.msra.mxu0 0
    %701 = vmatprep.subr.bf16.mxu0 0
    %702 = vmatpush2.bf16.msra.mxu0 0
    %703 = vmatprep.subr.bf16.mxu0 0
    %704 = vmatpush2.bf16.msra.mxu0 0
    %705 = vmatprep.subr.bf16.mxu0 0
    %706 = vmatpush2.bf16.msra.mxu0 0
    %707 = vmatprep.subr.bf16.mxu0 0
    %708 = vmatpush2.bf16.msra.mxu0 0
    %709 = vmatprep.subr.bf16.mxu0 0
    %710 = vmatpush2.bf16.msra.mxu0 0
    %711 = vmatprep.subr.bf16.mxu0 0
    %712 = vmatpush2.bf16.msra.mxu0 0
    %713 = vmatprep.subr.bf16.mxu0 0
    %714 = vmatpush2.bf16.msra.mxu0 0
    %715 = vmatprep.mubr.bf16.mxu0 0
    %716 = vmatmul.mubr.bf16.gmra.mxu0 %v611
    %v717 = vpop.f32.mrf.mxu0
    %v718 = vadd.f32 %v633, %v717
    %v719 = vpop.f32.mrf.mxu0
    %v720 = vpop.f32.mrf.mxu0
    %v721 = vpop.f32.mrf.mxu0
    %722 = vdwg.mxu0
    %v723 = vmax.f32 %v718, 0.0
    %v724 = vmin.f32 %v723, 1.0
    %725 = vst [vmem:[#allocation10] sm:$0xff] %v724
    // Predicated region
    $region62: #{tpu_custom_call.1} parent=1 // pred_check
      _
    $region63: #{tpu_custom_call.1} parent=1 // pred_check_branch
      %727 = sbr.rel (0) target = $region65
    $region64: #{tpu_custom_call.1} parent=1 // pred_region
      %s729 = ssub.s32 128, 128
      %730 = vsyncadd [#allocation4], %s729
      %s732 = sshll.u32 [#allocation10], 4
      %s733 = int_to_ptr.vmem [resolvable:$true] %s732
      %735 = dma.vmem_to_hbm [thread:$0]  %s733, 128, %s11, [#allocation4]
    $region65: #{tpu_custom_call.1} parent=1 // pred_fallthru
      _
    // Predicated region
    $region66: #{tpu_custom_call.1} parent=1 // pred_check
      _
    $region67: #{tpu_custom_call.1} parent=1 // pred_check_branch
      %737 = sbr.rel (0) target = $region69
    $region68: #{tpu_custom_call.1} parent=1 // pred_region
      %738 = dma.done [#allocation4], 128
    $region69: #{tpu_custom_call.1} parent=1 // pred_fallthru
      _
    %739 = vsyncpa [#allocation3], 1
    %740 = vsyncpa [#allocation6], 1
    %741 = vsyncpa [#allocation9], 1
    %742 = vsyncpa [#allocation4], 1

</llo_original>
